<compile_context>
chip_gen: v5e
topology: v5e:2x2
jax: 0.10.0
libtpu: 0.0.40
codegen_flags: <defaults>
</compile_context>

<pallas_src>
import math

import jax
import jax.numpy as jnp
import numpy as np
from jax.experimental import pallas as pl
from jax.experimental.pallas import tpu as pltpu

# ----------------------------- problem sizes -----------------------------
N = 16          # nodes per graph
E = 32          # edges per graph
C_IN = 16       # irreps_node_input  = "16x0e"
C_OUT = 32      # irreps_node_hidden = "32x0e"
C_ATTR = 1      # irreps_node_attr   = "1x0e"
F0, F1 = 8, 16  # fc_neurons = [8, 16]; tp.weight_numel = C_IN
NUM_NEIGHBORS = 2.0


def _normalize2mom_silu_const() -> float:
    # e3nn's normalize2mom(silu): constant c s.t. E[(c*silu(z))^2] = 1 for z~N(0,1).
    z = np.linspace(-12.0, 12.0, 200001)
    phi = np.exp(-0.5 * z * z) / np.sqrt(2.0 * np.pi)
    silu = z / (1.0 + np.exp(-z))
    f = silu * silu * phi
    second_moment = float(np.sum(0.5 * (f[1:] + f[:-1]) * np.diff(z)))
    return float(1.0 / math.sqrt(second_moment))


C_SILU = _normalize2mom_silu_const()
C_S = math.sin(math.pi / 8.0)                   # self-connection coefficient
C_X = math.cos(math.pi / 8.0)                   # conv coefficient
INV_SQRT_CIN = 1.0 / math.sqrt(C_IN * C_ATTR)   # FCTP path normalization
INV_SQRT_F0 = 1.0 / math.sqrt(F0)               # e3nn FullyConnectedNet layer scaling
INV_SQRT_F1 = 1.0 / math.sqrt(F1)
INV_SQRT_NN = 1.0 / math.sqrt(NUM_NEIGHBORS)

# packed-weight column layout (single [C_IN, W_COLS] array, one DMA, one lane tile)
W_FC1_OFF = 0                              # cols [0,16)  rows [0,8) : w_fc1'
W_FC2_OFF = F1                             # cols [16,32)            : w_fc2'
W_SCL1_OFF = W_FC2_OFF + C_IN              # cols [32,80)            : [w_sc' | w_l1']
W_L2_OFF = W_SCL1_OFF + C_OUT + C_IN       # cols [80,112)           : w_l2'
W_COLS = W_L2_OFF + C_OUT                  # 112


# --------------------- parameter preparation (init-time) -------------------
def prepare_params(params):
    """Fold all scalar normalizations / blend coefficients into the weights and pack
    them into a single [C_IN, W_COLS] f32 matrix.  Done ONCE at module init."""
    w_fc1p = params["w_fc1"].astype(jnp.float32) * INV_SQRT_F0                    # [8, 16]
    w_fc2p = params["w_fc2"].astype(jnp.float32) * INV_SQRT_F1                    # [16, 16]
    w_scp = params["w_sc"].astype(jnp.float32) * (C_S * INV_SQRT_CIN)             # [16, 32]
    w_l1p = params["w_l1"].astype(jnp.float32) * INV_SQRT_CIN                     # [16, 16]
    w_l2p = params["w_l2"].astype(jnp.float32) * (C_X * INV_SQRT_CIN * INV_SQRT_NN)  # [16, 32]
    w_fc1_pad = jnp.zeros((C_IN, F1), jnp.float32).at[:F0, :].set(w_fc1p)
    w_pack = jnp.concatenate([w_fc1_pad, w_fc2p, w_scp, w_l1p, w_l2p], axis=1)
    assert w_pack.shape == (C_IN, W_COLS)
    return w_pack


# ------------------------------- kernel ----------------------------------
def _scaled_silu(x):
    # normalize2mom(silu): numerically stable sigmoid; reciprocal on the EUP slot.
    z = jnp.exp(-jnp.abs(x))
    inv = pl.reciprocal(1.0 + z, approx=True)
    return x * inv * jnp.where(x >= 0.0, 1.0, z) * C_SILU


def _mp_kernel(x_ref, attr_ref, src_ref, dst_ref, eattr_ref, escal_ref, w_ref, out_ref):
    f32 = jnp.float32
    x = x_ref[...]                              # [N, C_IN]
    a = attr_ref[...]                           # [N, 1]
    xa = x * a                                  # FCTP with "1x0e" attr

    w = w_ref[...]                              # [C_IN, W_COLS] pre-scaled packed weights
    w_fc1 = w[0:F0, W_FC1_OFF:W_FC1_OFF + F1]               # [8, 16]
    w_fc2 = w[:, W_FC2_OFF:W_FC2_OFF + C_IN]                # [16, 16]
    w_scl1 = w[:, W_SCL1_OFF:W_SCL1_OFF + C_OUT + C_IN]     # [16, 48] = [w_sc' | w_l1']
    w_l2 = w[:, W_L2_OFF:W_L2_OFF + C_OUT]                  # [16, 32]

    # self-connection + lin1 in a single MXU push against the packed weight block
    r = jnp.dot(xa, w_scl1, preferred_element_type=f32)     # [N, 48]
    sc = r[:, :C_OUT]                                       # already * sin(pi/8)/sqrt(Cin)
    xl = r[:, C_OUT:C_OUT + C_IN]                           # already * 1/sqrt(Cin)

    # per-edge tensor-product weights: e3nn FullyConnectedNet([8,16,16], silu)
    h = _scaled_silu(jnp.dot(escal_ref[...], w_fc1, preferred_element_type=f32))
    w_tp = jnp.dot(h, w_fc2, preferred_element_type=f32)    # [E, C_IN]

    # one-hot gather/scatter matrices built in-kernel from int32 edge indices;
    # edge_attr is folded into the gather rows, node_attr into the scatter rows.
    src = src_ref[...]                                      # [E, 1] int32
    dst = dst_ref[...]                                      # [1, E] int32
    eattr = eattr_ref[...]                                  # [E, 1]
    gather_oh = jnp.where(
        src == jax.lax.broadcasted_iota(jnp.int32, (E, N), 1), eattr, 0.0)   # [E, N]
    scatter_oh = jnp.where(
        dst == jax.lax.broadcasted_iota(jnp.int32, (N, E), 0), a, 0.0)       # [N, E]

    # gather along edge_src (MXU), 'uvu' TP with scalar edge attr, scatter along edge_dst
    x_src = jnp.dot(gather_oh, xl, preferred_element_type=f32)    # eattr_e * xl[src_e]
    msg = w_tp * x_src                                            # [E, C_IN]
    agga = jnp.dot(scatter_oh, msg, preferred_element_type=f32)   # attr_n * sum_{dst=n} msg

    # lin2 (1/sqrt(num_neighbors), cos(pi/8), 1/sqrt(Cin) already folded into w_l2')
    conv = jnp.dot(agga, w_l2, preferred_element_type=f32)        # [N, C_OUT]

    # Gate == normalize2mom(silu) for all-scalar hidden irreps (output_mask == 1)
    out_ref[...] = _scaled_silu(sc + conv)


# ------------------------------- wrappers ----------------------------------
def _mp_pallas(xb, ab, srcb, dstb, eattrb, escalb, w_pack):
    B = xb.shape[0]
    return pl.pallas_call(
        _mp_kernel,
        out_shape=jax.ShapeDtypeStruct((B, N, C_OUT), jnp.float32),
        grid=(B,),
        in_specs=[
            pl.BlockSpec((None, N, C_IN), lambda b: (b, 0, 0)),    # node features
            pl.BlockSpec((None, N, C_ATTR), lambda b: (b, 0, 0)),  # node attr
            pl.BlockSpec((None, E, 1), lambda b: (b, 0, 0)),       # edge_src (int32 column)
            pl.BlockSpec((None, 1, E), lambda b: (b, 0, 0)),       # edge_dst (int32 row)
            pl.BlockSpec((None, E, 1), lambda b: (b, 0, 0)),       # edge attr
            pl.BlockSpec((None, E, F0), lambda b: (b, 0, 0)),      # edge scalars
            pl.BlockSpec((C_IN, W_COLS), lambda b: (0, 0)),        # packed weights (resident)
        ],
        out_specs=pl.BlockSpec((None, N, C_OUT), lambda b: (b, 0, 0)),
        compiler_params=pltpu.CompilerParams(
            dimension_semantics=("parallel",)),   # batch axis shards across v7x TensorCores
    )(xb, ab, srcb, dstb, eattrb, escalb, w_pack)


def single_message_passing(node_features, node_attr, edge_src, edge_dst,
                           edge_attr, edge_scalars, w_pack):
    """Single-graph forward, matching the PyTorch module's interface."""
    xb = node_features[None]                                   # (1, N, C_IN)   metadata-only
    ab = node_attr[None]                                       # (1, N, 1)
    srcb = edge_src.astype(jnp.int32).reshape(1, E, 1)          # (1, E, 1)
    dstb = edge_dst.astype(jnp.int32).reshape(1, 1, E)          # (1, 1, E)
    eattrb = edge_attr[None]                                    # (1, E, 1)
    escalb = edge_scalars[None]                                 # (1, E, F0)
    return _mp_pallas(xb, ab, srcb, dstb, eattrb, escalb, w_pack)[0]


def batched_message_passing(node_features, node_attr, edge_src, edge_dst,
                            edge_attr, edge_scalars, w_pack):
    """Many graphs in one pallas_call (leading batch grid axis)."""
    B = node_features.shape[0]
    srcb = edge_src.astype(jnp.int32).reshape(B, E, 1)
    dstb = edge_dst.astype(jnp.int32).reshape(B, 1, E)
    return _mp_pallas(node_features, node_attr, srcb, dstb, edge_attr, edge_scalars, w_pack)


# --------------------------- pure-JAX reference ----------------------------
def _reference(node_features, node_attr, edge_src, edge_dst, edge_attr, edge_scalars, params):
    def silu(v):
        return v * jax.nn.sigmoid(v)
    xa = node_features * node_attr
    sc = xa @ params["w_sc"] * INV_SQRT_CIN
    xl = xa @ params["w_l1"] * INV_SQRT_CIN
    h = silu(edge_scalars @ params["w_fc1"] * INV_SQRT_F0) * C_SILU
    w_tp = h @ params["w_fc2"] * INV_SQRT_F1
    msg = w_tp * xl[edge_src] * edge_attr
    agg = jnp.zeros((N, C_IN), jnp.float32).at[edge_dst].add(msg) * INV_SQRT_NN
    conv = (agg * node_attr) @ params["w_l2"] * INV_SQRT_CIN
    return silu(C_S * sc + C_X * conv) * C_SILU


if __name__ == "__main__":
    key = jax.random.PRNGKey(0)
    ks = jax.random.split(key, 16)

    # --- single graph (matches the module's forward signature) ---
    node_features = jax.random.normal(ks[0], (N, C_IN), jnp.float32)
    node_attr = jnp.ones((N, C_ATTR), jnp.float32)      # typical "1x0e" node attribute
    edge_src = jax.random.randint(ks[1], (E,), 0, N)
    edge_dst = jax.random.randint(ks[2], (E,), 0, N)
    edge_attr = jnp.ones((E, 1), jnp.float32)            # sh(l=0) is constant for "1x0e"
    edge_scalars = jax.random.normal(ks[3], (E, F0), jnp.float32)

    # e3nn initializes all tensor-product / FC weights from N(0, 1)
    params = dict(
        w_fc1=jax.random.normal(ks[4], (F0, F1), jnp.float32),
        w_fc2=jax.random.normal(ks[5], (F1, C_IN), jnp.float32),
        w_sc=jax.random.normal(ks[6], (C_IN, C_OUT), jnp.float32),
        w_l1=jax.random.normal(ks[7], (C_IN, C_IN), jnp.float32),
        w_l2=jax.random.normal(ks[8], (C_IN, C_OUT), jnp.float32),
    )
    w_pack = prepare_params(params)   # init-time: fold norms + pack into one weight DMA

    out = single_message_passing(node_features, node_attr, edge_src, edge_dst,
                                 edge_attr, edge_scalars, w_pack)
    jax.block_until_ready(out)
    ref = _reference(node_features, node_attr, edge_src, edge_dst,
                     edge_attr, edge_scalars, params)
    np.testing.assert_allclose(np.asarray(out), np.asarray(ref), rtol=2e-2, atol=2e-2)

    # --- batched path: B graphs in one pallas_call (grid over batch, "parallel") ---
    B = 4
    xb = jax.random.normal(ks[9], (B, N, C_IN), jnp.float32)
    ab = jnp.ones((B, N, C_ATTR), jnp.float32)
    srcb = jax.random.randint(ks[10], (B, E), 0, N)
    dstb = jax.random.randint(ks[11], (B, E), 0, N)
    eab = jnp.ones((B, E, 1), jnp.float32)
    esb = jax.random.normal(ks[12], (B, E, F0), jnp.float32)

    outb = batched_message_passing(xb, ab, srcb, dstb, eab, esb, w_pack)
    jax.block_until_ready(outb)
    refb = jnp.stack([_reference(xb[i], ab[i], srcb[i], dstb[i], eab[i], esb[i], params)
                      for i in range(B)])
    np.testing.assert_allclose(np.asarray(outb), np.asarray(refb), rtol=2e-2, atol=2e-2)

    print("KERNEL_OK")
</pallas_src>

<mosaic_0001>
module attributes {stable_mosaic.version = 11 : i64} {
  func.func @_mp_kernel(%arg0: i32, %arg1: memref<1x16x16xf32, #tpu.memory_space<vmem>>, %arg2: memref<1x16x1xf32, #tpu.memory_space<vmem>>, %arg3: memref<1x32x1xi32, #tpu.memory_space<vmem>>, %arg4: memref<1x1x32xi32, #tpu.memory_space<vmem>>, %arg5: memref<1x32x1xf32, #tpu.memory_space<vmem>>, %arg6: memref<1x32x8xf32, #tpu.memory_space<vmem>>, %arg7: memref<16x112xf32, #tpu.memory_space<vmem>>, %arg8: memref<1x16x32xf32, #tpu.memory_space<vmem>>) attributes {dimension_semantics = [#tpu.dimension_semantics<parallel>], iteration_bounds = array<i64: 1>, scalar_prefetch = 0 : i64, scratch_operands = 0 : i64, tpu.core_type = #tpu.core_type<tc>, window_params = [{transform_indices = @transform_0, window_bounds = array<i64: 1, 16, 16>}, {transform_indices = @transform_1, window_bounds = array<i64: 1, 16, 1>}, {transform_indices = @transform_2, window_bounds = array<i64: 1, 32, 1>}, {transform_indices = @transform_3, window_bounds = array<i64: 1, 1, 32>}, {transform_indices = @transform_4, window_bounds = array<i64: 1, 32, 1>}, {transform_indices = @transform_5, window_bounds = array<i64: 1, 32, 8>}, {pipeline_mode = #tpu.pipeline_mode<synchronous>, transform_indices = @transform_6, window_bounds = array<i64: 16, 112>}, {transform_indices = @transform_7, window_bounds = array<i64: 1, 16, 32>}]} {
    %c0 = arith.constant 0 : index
    %c0_0 = arith.constant 0 : index
    %c0_1 = arith.constant 0 : index
    %0 = vector.load %arg1[%c0, %c0_0, %c0_1] : memref<1x16x16xf32, #tpu.memory_space<vmem>>, vector<1x16x16xf32>
    %1 = vector.shape_cast %0 : vector<1x16x16xf32> to vector<16x16xf32>
    %c0_2 = arith.constant 0 : index
    %c0_3 = arith.constant 0 : index
    %c0_4 = arith.constant 0 : index
    %2 = vector.load %arg2[%c0_2, %c0_3, %c0_4] : memref<1x16x1xf32, #tpu.memory_space<vmem>>, vector<1x16x1xf32>
    %3 = vector.shape_cast %2 : vector<1x16x1xf32> to vector<16x1xf32>
    %4 = vector.broadcast %3 : vector<16x1xf32> to vector<16x16xf32>
    %5 = arith.mulf %1, %4 : vector<16x16xf32>
    %c0_5 = arith.constant 0 : index
    %c0_6 = arith.constant 0 : index
    %6 = vector.load %arg7[%c0_5, %c0_6] : memref<16x112xf32, #tpu.memory_space<vmem>>, vector<16x112xf32>
    %7 = vector.extract_strided_slice %6 {offsets = [0, 0], sizes = [8, 16], strides = [1, 1]} : vector<16x112xf32> to vector<8x16xf32>
    %8 = vector.extract_strided_slice %6 {offsets = [0, 16], sizes = [16, 16], strides = [1, 1]} : vector<16x112xf32> to vector<16x16xf32>
    %9 = vector.extract_strided_slice %6 {offsets = [0, 32], sizes = [16, 48], strides = [1, 1]} : vector<16x112xf32> to vector<16x48xf32>
    %10 = vector.extract_strided_slice %6 {offsets = [0, 80], sizes = [16, 32], strides = [1, 1]} : vector<16x112xf32> to vector<16x32xf32>
    %cst = arith.constant dense<0.000000e+00> : vector<16x48xf32>
    %11 = tpu.matmul %5, %9, %cst {dimension_numbers = #tpu.dot_dimension_numbers<[1], [0], [0], [1], [0, 0, 1, 1], [], []>} : vector<16x16xf32>, vector<16x48xf32>, vector<16x48xf32> -> vector<16x48xf32>
    %12 = vector.extract_strided_slice %11 {offsets = [0, 0], sizes = [16, 32], strides = [1, 1]} : vector<16x48xf32> to vector<16x32xf32>
    %13 = vector.extract_strided_slice %11 {offsets = [0, 32], sizes = [16, 16], strides = [1, 1]} : vector<16x48xf32> to vector<16x16xf32>
    %c0_7 = arith.constant 0 : index
    %c0_8 = arith.constant 0 : index
    %c0_9 = arith.constant 0 : index
    %14 = vector.load %arg6[%c0_7, %c0_8, %c0_9] : memref<1x32x8xf32, #tpu.memory_space<vmem>>, vector<1x32x8xf32>
    %15 = vector.shape_cast %14 : vector<1x32x8xf32> to vector<32x8xf32>
    %cst_10 = arith.constant dense<0.000000e+00> : vector<32x16xf32>
    %16 = tpu.matmul %15, %7, %cst_10 {dimension_numbers = #tpu.dot_dimension_numbers<[1], [0], [0], [1], [0, 0, 1, 1], [], []>} : vector<32x8xf32>, vector<8x16xf32>, vector<32x16xf32> -> vector<32x16xf32>
    %17 = math.absf %16 : vector<32x16xf32>
    %cst_11 = arith.constant 0.000000e+00 : f32
    %18 = vector.broadcast %cst_11 : f32 to vector<32x16xf32>
    %19 = arith.subf %18, %17 : vector<32x16xf32>
    %20 = math.exp %19 : vector<32x16xf32>
    %cst_12 = arith.constant 1.000000e+00 : f32
    %21 = vector.broadcast %cst_12 : f32 to vector<32x16xf32>
    %22 = arith.addf %21, %20 : vector<32x16xf32>
    %23 = tpu.reciprocal %22 {approx = true} : vector<32x16xf32> -> vector<32x16xf32>
    %24 = arith.mulf %16, %23 : vector<32x16xf32>
    %cst_13 = arith.constant 0.000000e+00 : f32
    %25 = vector.broadcast %cst_13 : f32 to vector<32x16xf32>
    %26 = arith.cmpf oge, %16, %25 : vector<32x16xf32>
    %cst_14 = arith.constant 1.000000e+00 : f32
    %27 = vector.broadcast %cst_14 : f32 to vector<32x16xf32>
    %28 = arith.select %26, %27, %20 : vector<32x16xi1>, vector<32x16xf32>
    %29 = arith.mulf %24, %28 : vector<32x16xf32>
    %cst_15 = arith.constant 1.67653251 : f32
    %30 = vector.broadcast %cst_15 : f32 to vector<32x16xf32>
    %31 = arith.mulf %29, %30 : vector<32x16xf32>
    %cst_16 = arith.constant dense<0.000000e+00> : vector<32x16xf32>
    %32 = tpu.matmul %31, %8, %cst_16 {dimension_numbers = #tpu.dot_dimension_numbers<[1], [0], [0], [1], [0, 0, 1, 1], [], []>} : vector<32x16xf32>, vector<16x16xf32>, vector<32x16xf32> -> vector<32x16xf32>
    %c0_17 = arith.constant 0 : index
    %c0_18 = arith.constant 0 : index
    %c0_19 = arith.constant 0 : index
    %33 = vector.load %arg3[%c0_17, %c0_18, %c0_19] : memref<1x32x1xi32, #tpu.memory_space<vmem>>, vector<1x32x1xi32>
    %34 = vector.shape_cast %33 : vector<1x32x1xi32> to vector<32x1xi32>
    %c0_20 = arith.constant 0 : index
    %c0_21 = arith.constant 0 : index
    %c0_22 = arith.constant 0 : index
    %35 = vector.load %arg4[%c0_20, %c0_21, %c0_22] : memref<1x1x32xi32, #tpu.memory_space<vmem>>, vector<1x1x32xi32>
    %36 = vector.shape_cast %35 : vector<1x1x32xi32> to vector<1x32xi32>
    %c0_23 = arith.constant 0 : index
    %c0_24 = arith.constant 0 : index
    %c0_25 = arith.constant 0 : index
    %37 = vector.load %arg5[%c0_23, %c0_24, %c0_25] : memref<1x32x1xf32, #tpu.memory_space<vmem>>, vector<1x32x1xf32>
    %38 = vector.shape_cast %37 : vector<1x32x1xf32> to vector<32x1xf32>
    %39 = tpu.iota {dimensions = array<i32: 1>} : vector<32x16xi32>
    %40 = vector.broadcast %34 : vector<32x1xi32> to vector<32x16xi32>
    %41 = arith.cmpi eq, %40, %39 : vector<32x16xi32>
    %cst_26 = arith.constant 0.000000e+00 : f32
    %42 = vector.shape_cast %38 : vector<32x1xf32> to vector<32x1xf32>
    %43 = vector.broadcast %42 : vector<32x1xf32> to vector<32x16xf32>
    %44 = vector.broadcast %cst_26 : f32 to vector<32x16xf32>
    %45 = arith.select %41, %43, %44 : vector<32x16xi1>, vector<32x16xf32>
    %46 = tpu.iota {dimensions = array<i32: 0>} : vector<16x32xi32>
    %47 = vector.broadcast %36 : vector<1x32xi32> to vector<16x32xi32>
    %48 = arith.cmpi eq, %47, %46 : vector<16x32xi32>
    %cst_27 = arith.constant 0.000000e+00 : f32
    %49 = vector.shape_cast %3 : vector<16x1xf32> to vector<16x1xf32>
    %50 = vector.broadcast %49 : vector<16x1xf32> to vector<16x32xf32>
    %51 = vector.broadcast %cst_27 : f32 to vector<16x32xf32>
    %52 = arith.select %48, %50, %51 : vector<16x32xi1>, vector<16x32xf32>
    %cst_28 = arith.constant dense<0.000000e+00> : vector<32x16xf32>
    %53 = tpu.matmul %45, %13, %cst_28 {dimension_numbers = #tpu.dot_dimension_numbers<[1], [0], [0], [1], [0, 0, 1, 1], [], []>} : vector<32x16xf32>, vector<16x16xf32>, vector<32x16xf32> -> vector<32x16xf32>
    %54 = arith.mulf %32, %53 : vector<32x16xf32>
    %cst_29 = arith.constant dense<0.000000e+00> : vector<16x16xf32>
    %55 = tpu.matmul %52, %54, %cst_29 {dimension_numbers = #tpu.dot_dimension_numbers<[1], [0], [0], [1], [0, 0, 1, 1], [], []>} : vector<16x32xf32>, vector<32x16xf32>, vector<16x16xf32> -> vector<16x16xf32>
    %cst_30 = arith.constant dense<0.000000e+00> : vector<16x32xf32>
    %56 = tpu.matmul %55, %10, %cst_30 {dimension_numbers = #tpu.dot_dimension_numbers<[1], [0], [0], [1], [0, 0, 1, 1], [], []>} : vector<16x16xf32>, vector<16x32xf32>, vector<16x32xf32> -> vector<16x32xf32>
    %57 = arith.addf %12, %56 : vector<16x32xf32>
    %58 = math.absf %57 : vector<16x32xf32>
    %cst_31 = arith.constant 0.000000e+00 : f32
    %59 = vector.broadcast %cst_31 : f32 to vector<16x32xf32>
    %60 = arith.subf %59, %58 : vector<16x32xf32>
    %61 = math.exp %60 : vector<16x32xf32>
    %cst_32 = arith.constant 1.000000e+00 : f32
    %62 = vector.broadcast %cst_32 : f32 to vector<16x32xf32>
    %63 = arith.addf %62, %61 : vector<16x32xf32>
    %64 = tpu.reciprocal %63 {approx = true} : vector<16x32xf32> -> vector<16x32xf32>
    %65 = arith.mulf %57, %64 : vector<16x32xf32>
    %cst_33 = arith.constant 0.000000e+00 : f32
    %66 = vector.broadcast %cst_33 : f32 to vector<16x32xf32>
    %67 = arith.cmpf oge, %57, %66 : vector<16x32xf32>
    %cst_34 = arith.constant 1.000000e+00 : f32
    %68 = vector.broadcast %cst_34 : f32 to vector<16x32xf32>
    %69 = arith.select %67, %68, %61 : vector<16x32xi1>, vector<16x32xf32>
    %70 = arith.mulf %65, %69 : vector<16x32xf32>
    %cst_35 = arith.constant 1.67653251 : f32
    %71 = vector.broadcast %cst_35 : f32 to vector<16x32xf32>
    %72 = arith.mulf %70, %71 : vector<16x32xf32>
    %c0_36 = arith.constant 0 : index
    %c0_37 = arith.constant 0 : index
    %c0_38 = arith.constant 0 : index
    %73 = vector.load %arg8[%c0_36, %c0_37, %c0_38] : memref<1x16x32xf32, #tpu.memory_space<vmem>>, vector<1x16x32xf32>
    %74 = vector.shape_cast %73 : vector<1x16x32xf32> to vector<16x32xf32>
    %75 = vector.shape_cast %72 : vector<16x32xf32> to vector<1x16x32xf32>
    tpu.vector_store %arg8[%c0_36, %c0_37, %c0_38], %75 {strides = array<i32>} : memref<1x16x32xf32, #tpu.memory_space<vmem>>, vector<1x16x32xf32>,
    return
  }
  func.func @transform_0(%arg0: i32) -> (i32, i32, i32) {
    %c0_i32 = arith.constant 0 : i32
    %c0_i32_0 = arith.constant 0 : i32
    %c0_i32_1 = arith.constant 0 : i32
    return %arg0, %c0_i32, %c0_i32_0 : i32, i32, i32
  }
  func.func @transform_1(%arg0: i32) -> (i32, i32, i32) {
    %c0_i32 = arith.constant 0 : i32
    %c0_i32_0 = arith.constant 0 : i32
    %c0_i32_1 = arith.constant 0 : i32
    return %arg0, %c0_i32, %c0_i32_0 : i32, i32, i32
  }
  func.func @transform_2(%arg0: i32) -> (i32, i32, i32) {
    %c0_i32 = arith.constant 0 : i32
    %c0_i32_0 = arith.constant 0 : i32
    %c0_i32_1 = arith.constant 0 : i32
    return %arg0, %c0_i32, %c0_i32_0 : i32, i32, i32
  }
  func.func @transform_3(%arg0: i32) -> (i32, i32, i32) {
    %c0_i32 = arith.constant 0 : i32
    %c0_i32_0 = arith.constant 0 : i32
    %c0_i32_1 = arith.constant 0 : i32
    return %arg0, %c0_i32, %c0_i32_0 : i32, i32, i32
  }
  func.func @transform_4(%arg0: i32) -> (i32, i32, i32) {
    %c0_i32 = arith.constant 0 : i32
    %c0_i32_0 = arith.constant 0 : i32
    %c0_i32_1 = arith.constant 0 : i32
    return %arg0, %c0_i32, %c0_i32_0 : i32, i32, i32
  }
  func.func @transform_5(%arg0: i32) -> (i32, i32, i32) {
    %c0_i32 = arith.constant 0 : i32
    %c0_i32_0 = arith.constant 0 : i32
    %c0_i32_1 = arith.constant 0 : i32
    return %arg0, %c0_i32, %c0_i32_0 : i32, i32, i32
  }
  func.func @transform_6(%arg0: i32) -> (i32, i32) {
    %c0_i32 = arith.constant 0 : i32
    %c0_i32_0 = arith.constant 0 : i32
    %c0_i32_1 = arith.constant 0 : i32
    return %c0_i32, %c0_i32_0 : i32, i32
  }
  func.func @transform_7(%arg0: i32) -> (i32, i32, i32) {
    %c0_i32 = arith.constant 0 : i32
    %c0_i32_0 = arith.constant 0 : i32
    %c0_i32_1 = arith.constant 0 : i32
    return %arg0, %c0_i32, %c0_i32_0 : i32, i32, i32
  }
}

</mosaic_0001>

<llo_original>
// kernel: tpu_custom_call.1
$region0: #{tpu_custom_call.1}
  #allocation0 [shape = 'u32[]', space=smem, size = 0x4, offset = 0x4, fixed_abs, tag = 'smem constant byte address 0x4 - core index']
  #allocation1 [shape = 'u32[72,128]{1,0:T(1,128)}', space=vmem, size = 0x9000, scoped, tag = 'internal scratch']
  %s0 = inlined_call_operand.vmem [shape: f32[1,16,16], index: 0, kind: input, shape index: {}]
  %s1 = inlined_call_operand.vmem [shape: f32[1,16,1], index: 1, kind: input, shape index: {}]
  %s2 = inlined_call_operand.vmem [shape: s32[1,32,1], index: 2, kind: input, shape index: {}]
  %s3 = inlined_call_operand.vmem [shape: s32[1,1,32], index: 3, kind: input, shape index: {}]
  %s4 = inlined_call_operand.vmem [shape: f32[1,32,1], index: 4, kind: input, shape index: {}]
  %s5 = inlined_call_operand.vmem [shape: f32[1,32,8], index: 5, kind: input, shape index: {}]
  %s6 = inlined_call_operand.vmem [shape: f32[16,112], index: 6, kind: input, shape index: {}]
  %s7 = inlined_call_operand.hbm [shape: f32[1,16,32], index: 7, kind: output, shape index: {}]
  %s8 = sld [smem:[#allocation0]]
  $region38: #{tpu_custom_call.1} parent=0
    _
  %s10 = ssub.s32 1, %s8
  %s11 = scalar_select 0, %s10, %s8
  $region1: #{tpu_custom_call.1} parent=0
    #allocation2 [shape = 'u8[8192]{0}', space=vmem, size = 0x2000, scoped, tag = 'output window, operand 0, single buffered']
    #allocation3 [shape = 's32[1]{0}', space=sflag, size = 0x4, scoped, tag = 'scoped memory for tpu_custom_call.1']
    %12 = vsyncpa [#allocation3], 0
    // Predicated region
    $region2: #{tpu_custom_call.1} parent=1 // pred_check
      _
    $region3: #{tpu_custom_call.1} parent=1 // pred_check_branch
      %14 = sbr.rel (0) target = $region5
    $region4: #{tpu_custom_call.1} parent=1 // pred_region
      _
    $region5: #{tpu_custom_call.1} parent=1 // pred_fallthru
      _
    // Predicated region
    $region6: #{tpu_custom_call.1} parent=1 // pred_check
      _
    $region7: #{tpu_custom_call.1} parent=1 // pred_check_branch
      %16 = sbr.rel (0) target = $region9
    $region8: #{tpu_custom_call.1} parent=1 // pred_region
      _
    $region9: #{tpu_custom_call.1} parent=1 // pred_fallthru
      _
    // Predicated region
    $region10: #{tpu_custom_call.1} parent=1 // pred_check
      _
    $region11: #{tpu_custom_call.1} parent=1 // pred_check_branch
      %18 = sbr.rel (0) target = $region13
    $region12: #{tpu_custom_call.1} parent=1 // pred_region
      _
    $region13: #{tpu_custom_call.1} parent=1 // pred_fallthru
      _
    // Predicated region
    $region14: #{tpu_custom_call.1} parent=1 // pred_check
      _
    $region15: #{tpu_custom_call.1} parent=1 // pred_check_branch
      %20 = sbr.rel (0) target = $region17
    $region16: #{tpu_custom_call.1} parent=1 // pred_region
      _
    $region17: #{tpu_custom_call.1} parent=1 // pred_fallthru
      _
    // Predicated region
    $region18: #{tpu_custom_call.1} parent=1 // pred_check
      _
    $region19: #{tpu_custom_call.1} parent=1 // pred_check_branch
      %22 = sbr.rel (0) target = $region21
    $region20: #{tpu_custom_call.1} parent=1 // pred_region
      _
    $region21: #{tpu_custom_call.1} parent=1 // pred_fallthru
      _
    // Predicated region
    $region22: #{tpu_custom_call.1} parent=1 // pred_check
      _
    $region23: #{tpu_custom_call.1} parent=1 // pred_check_branch
      %24 = sbr.rel (0) target = $region25
    $region24: #{tpu_custom_call.1} parent=1 // pred_region
      _
    $region25: #{tpu_custom_call.1} parent=1 // pred_fallthru
      _
    // Predicated region
    $region26: #{tpu_custom_call.1} parent=1 // pred_check
      _
    $region27: #{tpu_custom_call.1} parent=1 // pred_check_branch
      %26 = sbr.rel (0) target = $region29
    $region28: #{tpu_custom_call.1} parent=1 // pred_region
      _
    $region29: #{tpu_custom_call.1} parent=1 // pred_fallthru
      _
    %v27 = vld [vmem:[%s0] sm:$0xff]
    %v28 = vld [vmem:[%s0 + $0x8] sm:$0xff]
    %v29 = vld [vmem:[%s1] sm:$0xff]
    %v30 = vld [vmem:[%s1 + $0x8] sm:$0xff]
    %32 = vset.pattern.permute.xlu0 0
    %33 = vperm.xlu0 %32, %v29
    %v34 = vpop.permute.xlu0 %33
    %37 = vset.pattern.permute.xlu0 0
    %38 = vperm.xlu0 %37, %v30
    %v39 = vpop.permute.xlu0 %38
    %v41 = vmul.f32 %v27, %v34
    %v42 = vmul.f32 %v28, %v39
    %v43 = vld [vmem:[%s6] sm:$0xff]
    %v44 = vld [vmem:[%s6 + $0x8] sm:$0xff]
    %47 = vrot.lane.b32.xlu0 %v43, 96
    %v48 = vpop.permute.xlu0 %47
    %49 = vrot.lane.b32.xlu0 %v44, 96
    %v50 = vpop.permute.xlu0 %49
    %vm53 = vcmask 130048
    %v55 = vsel %vm53, %v41, 0
    %v58 = vsel %vm53, %v42, 0
    %60 = vmatpush.msra.mxu0 0.0
    %61 = vmatpush.msra.mxu0 0.0
    %62 = vmatpush.msra.mxu0 0.0
    %63 = vmatpush.msra.mxu0 0.0
    %64 = vmatpush.msra.mxu0 0.0
    %65 = vmatpush.msra.mxu0 0.0
    %66 = vmatpush.msra.mxu0 0.0
    %67 = vmatpush.msra.mxu0 0.0
    %68 = vmatpush.msra.mxu0 0.0
    %69 = vmatpush.msra.mxu0 0.0
    %70 = vmatpush.msra.mxu0 0.0
    %71 = vmatpush.msra.mxu0 0.0
    %72 = vmatpush.msra.mxu0 0.0
    %73 = vmatpush.msra.mxu0 0.0
    %74 = vmatpush.msra.mxu0 %v50
    %75 = vmatpush.msra.mxu0 %v48
    %76 = vmatmul.f32.gmra.mxu0 %v55
    %v77 = vpop.f32.mrf.mxu0
    %v78 = vadd.f32 0.0, %v77
    %79 = vmatmul.f32.gmra.mxu0 %v58
    %v80 = vpop.f32.mrf.mxu0
    %v81 = vadd.f32 0.0, %v80
    %82 = vdwg.mxu0
    %v83 = vld [vmem:[%s5] sm:$0xff]
    %v84 = vld [vmem:[%s5 + $0x8] sm:$0xff]
    %v85 = vld [vmem:[%s5 + $0x10] sm:$0xff]
    %v86 = vld [vmem:[%s5 + $0x18] sm:$0xff]
    %vm87 = vcmask 64512
    %v89 = vsel %vm87, %v83, 0
    %v92 = vsel %vm87, %v84, 0
    %v95 = vsel %vm87, %v85, 0
    %v98 = vsel %vm87, %v86, 0
    %100 = vmatpush.msra.mxu0 0.0
    %101 = vmatpush.msra.mxu0 0.0
    %102 = vmatpush.msra.mxu0 0.0
    %103 = vmatpush.msra.mxu0 0.0
    %104 = vmatpush.msra.mxu0 0.0
    %105 = vmatpush.msra.mxu0 0.0
    %106 = vmatpush.msra.mxu0 0.0
    %107 = vmatpush.msra.mxu0 0.0
    %108 = vmatpush.msra.mxu0 0.0
    %109 = vmatpush.msra.mxu0 0.0
    %110 = vmatpush.msra.mxu0 0.0
    %111 = vmatpush.msra.mxu0 0.0
    %112 = vmatpush.msra.mxu0 0.0
    %113 = vmatpush.msra.mxu0 0.0
    %114 = vmatpush.msra.mxu0 0.0
    %115 = vmatpush.msra.mxu0 %v43
    %116 = vmatmul.f32.gmra.mxu0 %v89
    %v117 = vpop.f32.mrf.mxu0
    %v118 = vadd.f32 0.0, %v117
    %119 = vmatmul.f32.gmra.mxu0 %v92
    %v120 = vpop.f32.mrf.mxu0
    %v121 = vadd.f32 0.0, %v120
    %122 = vmatmul.f32.gmra.mxu0 %v95
    %v123 = vpop.f32.mrf.mxu0
    %v124 = vadd.f32 0.0, %v123
    %125 = vmatmul.f32.gmra.mxu0 %v98
    %v126 = vpop.f32.mrf.mxu0
    %v127 = vadd.f32 0.0, %v126
    %128 = vdwg.mxu0
    %v129 = vand.u32 2147483647, %v118
    %v130 = vand.u32 2147483647, %v121
    %v131 = vand.u32 2147483647, %v124
    %v132 = vand.u32 2147483647, %v127
    %v133 = vsub.f32 0.0, %v129
    %v134 = vsub.f32 0.0, %v130
    %v135 = vsub.f32 0.0, %v131
    %v136 = vsub.f32 0.0, %v132
    %v137 = vmul.f32 %v133, 1.442695
    %v138 = vpow.pop %v137
    %v139 = vmul.f32 %v134, 1.442695
    %v140 = vpow.pop %v139
    %v141 = vmul.f32 %v135, 1.442695
    %v142 = vpow.pop %v141
    %v143 = vmul.f32 %v136, 1.442695
    %v144 = vpow.pop %v143
    %v145 = vadd.f32 %v138, 1.0
    %v146 = vadd.f32 %v140, 1.0
    %v147 = vadd.f32 %v142, 1.0
    %v148 = vadd.f32 %v144, 1.0
    %v149 = vrcp.pop %v145
    %v150 = vrcp.pop %v146
    %v151 = vrcp.pop %v147
    %v152 = vrcp.pop %v148
    %v153 = vmul.f32 %v118, %v149
    %v154 = vmul.f32 %v121, %v150
    %v155 = vmul.f32 %v124, %v151
    %v156 = vmul.f32 %v127, %v152
    %vm157 = vcmp.ge.f32.partialorder %v118, 0.0
    %vm158 = vcmp.ge.f32.partialorder %v121, 0.0
    %vm159 = vcmp.ge.f32.partialorder %v124, 0.0
    %vm160 = vcmp.ge.f32.partialorder %v127, 0.0
    %v161 = vsel %vm157, 1.0, %v138
    %v162 = vsel %vm158, 1.0, %v140
    %v163 = vsel %vm159, 1.0, %v142
    %v164 = vsel %vm160, 1.0, %v144
    %v165 = vmul.f32 %v153, %v161
    %v166 = vmul.f32 %v154, %v162
    %v167 = vmul.f32 %v155, %v163
    %v168 = vmul.f32 %v156, %v164
    %v169 = vmul.f32 %v165, 1.6765325
    %v170 = vmul.f32 %v166, 1.6765325
    %v171 = vmul.f32 %v167, 1.6765325
    %v172 = vmul.f32 %v168, 1.6765325
    %173 = vrot.lane.b32.xlu0 %v43, 112
    %v174 = vpop.permute.xlu0 %173
    %175 = vrot.lane.b32.xlu0 %v44, 112
    %v176 = vpop.permute.xlu0 %175
    %v180 = vsel %vm53, %v169, 0
    %v183 = vsel %vm53, %v170, 0
    %v186 = vsel %vm53, %v171, 0
    %v189 = vsel %vm53, %v172, 0
    %191 = vmatpush.msra.mxu0 0.0
    %192 = vmatpush.msra.mxu0 0.0
    %193 = vmatpush.msra.mxu0 0.0
    %194 = vmatpush.msra.mxu0 0.0
    %195 = vmatpush.msra.mxu0 0.0
    %196 = vmatpush.msra.mxu0 0.0
    %197 = vmatpush.msra.mxu0 0.0
    %198 = vmatpush.msra.mxu0 0.0
    %199 = vmatpush.msra.mxu0 0.0
    %200 = vmatpush.msra.mxu0 0.0
    %201 = vmatpush.msra.mxu0 0.0
    %202 = vmatpush.msra.mxu0 0.0
    %203 = vmatpush.msra.mxu0 0.0
    %204 = vmatpush.msra.mxu0 0.0
    %205 = vmatpush.msra.mxu0 %v176
    %206 = vmatpush.msra.mxu0 %v174
    %207 = vmatmul.f32.gmra.mxu0 %v180
    %v208 = vpop.f32.mrf.mxu0
    %v209 = vadd.f32 0.0, %v208
    %210 = vmatmul.f32.gmra.mxu0 %v183
    %v211 = vpop.f32.mrf.mxu0
    %v212 = vadd.f32 0.0, %v211
    %213 = vmatmul.f32.gmra.mxu0 %v186
    %v214 = vpop.f32.mrf.mxu0
    %v215 = vadd.f32 0.0, %v214
    %216 = vmatmul.f32.gmra.mxu0 %v189
    %v217 = vpop.f32.mrf.mxu0
    %v218 = vadd.f32 0.0, %v217
    %219 = vdwg.mxu0
    %v220 = vld [vmem:[%s2] sm:$0xff]
    %v221 = vld [vmem:[%s2 + $0x8] sm:$0xff]
    %v222 = vld [vmem:[%s2 + $0x10] sm:$0xff]
    %v223 = vld [vmem:[%s2 + $0x18] sm:$0xff]
    %v224 = vld [vmem:[%s3] sm:$0x1]
    %v225 = vld [vmem:[%s4] sm:$0xff]
    %v226 = vld [vmem:[%s4 + $0x8] sm:$0xff]
    %v227 = vld [vmem:[%s4 + $0x10] sm:$0xff]
    %v228 = vld [vmem:[%s4 + $0x18] sm:$0xff]
    %v229 = vlaneseq
    %v230 = vand.u32 %v229, 127
    %231 = vset.pattern.permute.xlu0 0
    %232 = vperm.xlu0 %231, %v220
    %v233 = vpop.permute.xlu0 %232
    %234 = vset.pattern.permute.xlu0 0
    %235 = vperm.xlu0 %234, %v221
    %v236 = vpop.permute.xlu0 %235
    %237 = vset.pattern.permute.xlu0 0
    %238 = vperm.xlu0 %237, %v222
    %v239 = vpop.permute.xlu0 %238
    %240 = vset.pattern.permute.xlu0 0
    %241 = vperm.xlu0 %240, %v223
    %v242 = vpop.permute.xlu0 %241
    %vm243 = vcmp.eq.s32.totalorder %v233, %v230
    %vm244 = vcmp.eq.s32.totalorder %v236, %v230
    %vm245 = vcmp.eq.s32.totalorder %v239, %v230
    %vm246 = vcmp.eq.s32.totalorder %v242, %v230
    %248 = vset.pattern.permute.xlu0 0
    %249 = vperm.xlu0 %248, %v225
    %v250 = vpop.permute.xlu0 %249
    %253 = vset.pattern.permute.xlu0 0
    %254 = vperm.xlu0 %253, %v226
    %v255 = vpop.permute.xlu0 %254
    %258 = vset.pattern.permute.xlu0 0
    %259 = vperm.xlu0 %258, %v227
    %v260 = vpop.permute.xlu0 %259
    %263 = vset.pattern.permute.xlu0 0
    %264 = vperm.xlu0 %263, %v228
    %v265 = vpop.permute.xlu0 %264
    %v267 = vsel %vm243, %v250, 0.0
    %v268 = vsel %vm244, %v255, 0.0
    %v269 = vsel %vm245, %v260, 0.0
    %v270 = vsel %vm246, %v265, 0.0
    %v271 = vlaneseq
    %v272 = vshrl.u32 %v271, 7
    %v273 = vadd.s32 %v272, 8
    %v274 = vperm.slane %v224, 0
    %vm275 = vcmp.eq.s32.totalorder %v274, %v272
    %vm276 = vcmp.eq.s32.totalorder %v274, %v273
    %v277 = vsel %vm275, %v34, 0.0
    %v278 = vsel %vm276, %v39, 0.0
    %281 = vrot.lane.b32.xlu0 %v78, 96
    %v282 = vpop.permute.xlu0 %281
    %283 = vrot.lane.b32.xlu0 %v81, 96
    %v284 = vpop.permute.xlu0 %283
    %v288 = vsel %vm53, %v267, 0
    %v291 = vsel %vm53, %v268, 0
    %v294 = vsel %vm53, %v269, 0
    %v297 = vsel %vm53, %v270, 0
    %299 = vmatpush.msra.mxu0 0.0
    %300 = vmatpush.msra.mxu0 0.0
    %301 = vmatpush.msra.mxu0 0.0
    %302 = vmatpush.msra.mxu0 0.0
    %303 = vmatpush.msra.mxu0 0.0
    %304 = vmatpush.msra.mxu0 0.0
    %305 = vmatpush.msra.mxu0 0.0
    %306 = vmatpush.msra.mxu0 0.0
    %307 = vmatpush.msra.mxu0 0.0
    %308 = vmatpush.msra.mxu0 0.0
    %309 = vmatpush.msra.mxu0 0.0
    %310 = vmatpush.msra.mxu0 0.0
    %311 = vmatpush.msra.mxu0 0.0
    %312 = vmatpush.msra.mxu0 0.0
    %313 = vmatpush.msra.mxu0 %v284
    %314 = vmatpush.msra.mxu0 %v282
    %315 = vmatmul.f32.gmra.mxu0 %v288
    %v316 = vpop.f32.mrf.mxu0
    %v317 = vadd.f32 0.0, %v316
    %318 = vmatmul.f32.gmra.mxu0 %v291
    %v319 = vpop.f32.mrf.mxu0
    %v320 = vadd.f32 0.0, %v319
    %321 = vmatmul.f32.gmra.mxu0 %v294
    %v322 = vpop.f32.mrf.mxu0
    %v323 = vadd.f32 0.0, %v322
    %324 = vmatmul.f32.gmra.mxu0 %v297
    %v325 = vpop.f32.mrf.mxu0
    %v326 = vadd.f32 0.0, %v325
    %327 = vdwg.mxu0
    %v328 = vmul.f32 %v209, %v317
    %v329 = vmul.f32 %v212, %v320
    %v330 = vmul.f32 %v215, %v323
    %v331 = vmul.f32 %v218, %v326
    %vm332 = vcmask 261120
    %v334 = vsel %vm332, %v277, 0
    %v337 = vsel %vm332, %v278, 0
    %339 = vmatpush.msra.mxu0 0.0
    %340 = vmatpush.msra.mxu0 0.0
    %341 = vmatpush.msra.mxu0 0.0
    %342 = vmatpush.msra.mxu0 0.0
    %343 = vmatpush.msra.mxu0 0.0
    %344 = vmatpush.msra.mxu0 0.0
    %345 = vmatpush.msra.mxu0 0.0
    %346 = vmatpush.msra.mxu0 0.0
    %347 = vmatpush.msra.mxu0 0.0
    %348 = vmatpush.msra.mxu0 0.0
    %349 = vmatpush.msra.mxu0 0.0
    %350 = vmatpush.msra.mxu0 0.0
    %351 = vmatpush.msra.mxu0 %v331
    %352 = vmatpush.msra.mxu0 %v330
    %353 = vmatpush.msra.mxu0 %v329
    %354 = vmatpush.msra.mxu0 %v328
    %355 = vmatmul.f32.gmra.mxu0 %v334
    %v356 = vpop.f32.mrf.mxu0
    %v357 = vadd.f32 0.0, %v356
    %358 = vmatmul.f32.gmra.mxu0 %v337
    %v359 = vpop.f32.mrf.mxu0
    %v360 = vadd.f32 0.0, %v359
    %361 = vdwg.mxu0
    %362 = vrot.lane.b32.xlu0 %v43, 48
    %v363 = vpop.permute.xlu0 %362
    %364 = vrot.lane.b32.xlu0 %v44, 48
    %v365 = vpop.permute.xlu0 %364
    %v369 = vsel %vm53, %v357, 0
    %v372 = vsel %vm53, %v360, 0
    %374 = vmatpush.msra.mxu0 0.0
    %375 = vmatpush.msra.mxu0 0.0
    %376 = vmatpush.msra.mxu0 0.0
    %377 = vmatpush.msra.mxu0 0.0
    %378 = vmatpush.msra.mxu0 0.0
    %379 = vmatpush.msra.mxu0 0.0
    %380 = vmatpush.msra.mxu0 0.0
    %381 = vmatpush.msra.mxu0 0.0
    %382 = vmatpush.msra.mxu0 0.0
    %383 = vmatpush.msra.mxu0 0.0
    %384 = vmatpush.msra.mxu0 0.0
    %385 = vmatpush.msra.mxu0 0.0
    %386 = vmatpush.msra.mxu0 0.0
    %387 = vmatpush.msra.mxu0 0.0
    %388 = vmatpush.msra.mxu0 %v365
    %389 = vmatpush.msra.mxu0 %v363
    %390 = vmatmul.f32.gmra.mxu0 %v369
    %v391 = vpop.f32.mrf.mxu0
    %v392 = vadd.f32 0.0, %v391
    %393 = vmatmul.f32.gmra.mxu0 %v372
    %v394 = vpop.f32.mrf.mxu0
    %v395 = vadd.f32 0.0, %v394
    %396 = vdwg.mxu0
    %v397 = vadd.f32 %v78, %v392
    %v398 = vadd.f32 %v81, %v395
    %v399 = vand.u32 2147483647, %v397
    %v400 = vand.u32 2147483647, %v398
    %v401 = vsub.f32 0.0, %v399
    %v402 = vsub.f32 0.0, %v400
    %v403 = vmul.f32 %v401, 1.442695
    %v404 = vpow.pop %v403
    %v405 = vmul.f32 %v402, 1.442695
    %v406 = vpow.pop %v405
    %v407 = vadd.f32 %v404, 1.0
    %v408 = vadd.f32 %v406, 1.0
    %v409 = vrcp.pop %v407
    %v410 = vrcp.pop %v408
    %v411 = vmul.f32 %v397, %v409
    %v412 = vmul.f32 %v398, %v410
    %vm413 = vcmp.ge.f32.partialorder %v397, 0.0
    %vm414 = vcmp.ge.f32.partialorder %v398, 0.0
    %v415 = vsel %vm413, 1.0, %v404
    %v416 = vsel %vm414, 1.0, %v406
    %v417 = vmul.f32 %v411, %v415
    %v418 = vmul.f32 %v412, %v416
    %v419 = vmul.f32 %v417, 1.6765325
    %v420 = vmul.f32 %v418, 1.6765325
    %421 = vst.msk [vmem:[#allocation2] sm:$0xff] %vm332, %v419
    %422 = vst.msk [vmem:[#allocation2 + $0x8] sm:$0xff] %vm332, %v420
    // Predicated region
    $region30: #{tpu_custom_call.1} parent=1 // pred_check
      _
    $region31: #{tpu_custom_call.1} parent=1 // pred_check_branch
      %424 = sbr.rel (0) target = $region33
    $region32: #{tpu_custom_call.1} parent=1 // pred_region
      %426 = vsyncadd [#allocation3], 0
      %s427 = sshll.u32 [#allocation2], 4
      %s428 = int_to_ptr.vmem [resolvable:$true] %s427
      %s429 = sshll.u32 %s7, 4
      %s430 = int_to_ptr.hbm [resolvable:$true] %s429
      %435 = dma.vmem_to_hbm [thread:$0]  %s428, 256, %s430, [#allocation3], 128, 128, 8
    $region33: #{tpu_custom_call.1} parent=1 // pred_fallthru
      _
    // Predicated region
    $region34: #{tpu_custom_call.1} parent=1 // pred_check
      _
    $region35: #{tpu_custom_call.1} parent=1 // pred_check_branch
      %437 = sbr.rel (0) target = $region37
    $region36: #{tpu_custom_call.1} parent=1 // pred_region
      %439 = dma.done [#allocation3], 256
    $region37: #{tpu_custom_call.1} parent=1 // pred_fallthru
      _
    %440 = vsyncpa [#allocation3], 1

</llo_original>
